<compile_context>
chip_gen: v5e
topology: v5e:2x2
jax: 0.10.0
libtpu: 0.0.40
codegen_flags: <defaults>
</compile_context>

<pallas_src>
import math

import jax
import jax.numpy as jnp
from jax.experimental import pallas as pl
from jax.experimental.pallas import tpu as pltpu

_LANE = 128


def _round_up(a: int, m: int) -> int:
    return -(-a // m) * m


def make_pos_embedding(emb_size: int, max_len: int,
                       dtype=jnp.float32) -> jnp.ndarray:
    """Deterministic positional-encoding table, identical to the PyTorch init.

    Returns the PyTorch buffer layout (max_len, 1, emb_size).
    """
    den = jnp.exp(-jnp.arange(0, emb_size, 2, dtype=jnp.float32)
                  * math.log(10000.0) / emb_size)            # (E/2,)
    pos = jnp.arange(0, max_len, dtype=jnp.float32)[:, None]  # (L, 1)
    angles = pos * den[None, :]                               # (L, E/2)
    pe = jnp.zeros((max_len, emb_size), dtype=jnp.float32)
    pe = pe.at[:, 0::2].set(jnp.sin(angles))
    pe = pe.at[:, 1::2].set(jnp.cos(angles))
    return pe[:, None, :].astype(dtype)                       # (L, 1, E)


def _add_pe_kernel_3d(x_ref, pe_ref, o_ref):
    # x_ref/o_ref: (tile_s, B, E); pe_ref: (tile_s, E).
    # Broadcast over batch stays an expression (sublane broadcast in the add).
    o_ref[...] = (x_ref[...] + pe_ref[...][:, None, :]).astype(o_ref.dtype)


def _make_add_pe_kernel_lanefold(batch: int):
    def kernel(x_ref, pe_ref, o_ref):
        # x_ref/o_ref: (tile_s, B*E); pe_ref: (tile_s, E).
        pe = pe_ref[...]
        if batch > 1:
            # Replicate the PE row across the folded lane axis (static concat).
            pe = jnp.concatenate([pe] * batch, axis=-1)
        o_ref[...] = (x_ref[...] + pe).astype(o_ref.dtype)
    return kernel


def _vmem_budget():
    """Per-generation (budget_bytes, vmem_limit_bytes_or_None, force_two_steps)."""
    mib = 1024 * 1024
    kind = ""
    try:
        kind = jax.devices()[0].device_kind.lower()
    except Exception:
        pass
    vmem_cap = None
    try:
        vmem_cap = int(pltpu.get_tpu_info().vmem_capacity_bytes)
    except Exception:
        pass

    is_v7 = ("v7" in kind) or (vmem_cap is not None and vmem_cap <= 64 * mib)
    if is_v7:
        # 64 MiB physical per TC: ~24 MiB of tiles, explicit limit well inside.
        # Also make sure the grid keeps both TensorCores busy.
        return 24 * mib, 40 * mib, True
    if "v6" in kind:
        # 128 MiB physical, 32 MiB default scoped: push toward the 512-row point.
        return 26 * mib, 48 * mib, False
    # v5e / unknown: stay under the 16 MiB default scoped-VMEM limit.
    return 12 * mib, None, False


def _choose_tile_s(S: int, per_row_bytes: int, pack: int,
                   force_two_steps: bool, budget: int) -> int:
    rows = max(1, budget // per_row_bytes)
    rows = min(rows, 512)                        # ~512 rows saturates HBM BW
    rows = max(pack, (rows // pack) * pack)      # sublane-pack aligned tile_s
    tile_s = min(rows, _round_up(S, pack))
    if force_two_steps and S >= 2 * pack:
        # >= 2 grid steps so dimension_semantics=("parallel",) can shard the
        # S-tile axis across v7x's two TensorCores.
        tile_s = min(tile_s, _round_up(pl.cdiv(S, 2), pack))
    return tile_s


def positional_encoding_forward(token_embedding: jnp.ndarray,
                                pos_embedding: jnp.ndarray) -> jnp.ndarray:
    """token_embedding: (S, B, E); pos_embedding: (max_len, 1, E) buffer."""
    S, B, E = token_embedding.shape
    max_len = pos_embedding.shape[0]
    assert S <= max_len, f"sequence length {S} exceeds max_len {max_len}"

    dtype = token_embedding.dtype
    itemsize = dtype.itemsize
    pack = max(8, 32 // itemsize)        # sublane pack: 8 f32, 16 bf16, 32 int8

    # Squeeze the singleton batch dim (metadata-only) and unify dtypes.
    pe2d = jnp.reshape(pos_embedding, (max_len, E)).astype(dtype)

    budget, vmem_limit, force_two_steps = _vmem_budget()
    lane_fold = B < pack                 # small batch -> fold (B,E) into lanes

    # Per-S-row VMEM bytes, accounting for sublane padding of B (3D path) and
    # lane padding of E / B*E.
    row_pe = _round_up(E, _LANE) * itemsize
    if lane_fold:
        row_x = _round_up(B * E, _LANE) * itemsize
    else:
        row_x = _round_up(B, pack) * _round_up(E, _LANE) * itemsize
    # double-buffered x/out/pe tiles + one-row allowance for a compute temp
    per_row = 2 * (2 * row_x + row_pe) + row_x

    tile_s = _choose_tile_s(S, per_row, pack, force_two_steps, budget)
    grid = (pl.cdiv(S, tile_s),)

    # PE block starts are always < S <= max_len; pad only the rare edge where
    # the final partial block would overrun the table.
    needed = grid[0] * tile_s
    if needed > max_len:
        pe2d = jnp.pad(pe2d, ((0, needed - max_len), (0, 0)))

    cost = pl.CostEstimate(
        flops=S * B * E,
        transcendentals=0,
        bytes_accessed=(2 * S * B * E + S * E) * itemsize,
    )
    cparams = pltpu.CompilerParams(
        dimension_semantics=("parallel",),
        vmem_limit_bytes=vmem_limit,
    )
    pe_spec = pl.BlockSpec((tile_s, E), lambda i: (i, 0))

    if lane_fold:
        x2 = jnp.reshape(token_embedding, (S, B * E))   # contiguous, free
        out2 = pl.pallas_call(
            _make_add_pe_kernel_lanefold(B),
            out_shape=jax.ShapeDtypeStruct((S, B * E), dtype),
            grid_spec=pltpu.PrefetchScalarGridSpec(
                num_scalar_prefetch=0,
                grid=grid,
                in_specs=[pl.BlockSpec((tile_s, B * E), lambda i: (i, 0)),
                          pe_spec],
                out_specs=pl.BlockSpec((tile_s, B * E), lambda i: (i, 0)),
            ),
            compiler_params=cparams,
            cost_estimate=cost,
        )(x2, pe2d)
        return jnp.reshape(out2, (S, B, E))

    return pl.pallas_call(
        _add_pe_kernel_3d,
        out_shape=jax.ShapeDtypeStruct((S, B, E), dtype),
        grid_spec=pltpu.PrefetchScalarGridSpec(
            num_scalar_prefetch=0,
            grid=grid,
            in_specs=[pl.BlockSpec((tile_s, B, E), lambda i: (i, 0, 0)),
                      pe_spec],
            out_specs=pl.BlockSpec((tile_s, B, E), lambda i: (i, 0, 0)),
        ),
        compiler_params=cparams,
        cost_estimate=cost,
    )(token_embedding, pe2d)


if __name__ == "__main__":
    # TODO(synk): dropout with p > 0 (training mode) is not implemented; the
    # module default p=0 makes dropout an identity, which is what we compute.
    key = jax.random.PRNGKey(0)
    k0, k1 = jax.random.split(key)

    # Small-batch config -> exercises the lane-folded path (B < sublane pack).
    emb_size, max_len, seq, batch = 32, 64, 8, 2
    x = jax.random.normal(k0, (seq, batch, emb_size), dtype=jnp.float32)
    pos_embedding = make_pos_embedding(emb_size, max_len)
    out = jax.block_until_ready(positional_encoding_forward(x, pos_embedding))
    ref = x + pos_embedding[:seq]
    assert out.shape == (seq, batch, emb_size)
    assert jnp.allclose(out, ref, atol=1e-6), "mismatch vs reference (lane-fold)"

    # Larger-batch config -> exercises the 3D blocked path.
    emb_size2, max_len2, seq2, batch2 = 128, 64, 16, 8
    x2 = jax.random.normal(k1, (seq2, batch2, emb_size2), dtype=jnp.float32)
    pos_embedding2 = make_pos_embedding(emb_size2, max_len2)
    out2 = jax.block_until_ready(positional_encoding_forward(x2, pos_embedding2))
    ref2 = x2 + pos_embedding2[:seq2]
    assert out2.shape == (seq2, batch2, emb_size2)
    assert jnp.allclose(out2, ref2, atol=1e-6), "mismatch vs reference (3D)"

    print("KERNEL_OK")
</pallas_src>

<mosaic_0001>
module attributes {stable_mosaic.version = 11 : i64} {
  func.func @kernel(%arg0: i32, %arg1: memref<8x64xf32, #tpu.memory_space<vmem>>, %arg2: memref<8x32xf32, #tpu.memory_space<vmem>>, %arg3: memref<8x64xf32, #tpu.memory_space<vmem>>) attributes {dimension_semantics = [#tpu.dimension_semantics<parallel>], iteration_bounds = array<i64: 1>, scalar_prefetch = 0 : i64, scratch_operands = 0 : i64, tpu.core_type = #tpu.core_type<tc>, window_params = [{transform_indices = @transform_0, window_bounds = array<i64: 8, 64>}, {transform_indices = @transform_1, window_bounds = array<i64: 8, 32>}, {transform_indices = @transform_2, window_bounds = array<i64: 8, 64>}]} {
    %c0 = arith.constant 0 : index
    %c0_0 = arith.constant 0 : index
    %0 = vector.load %arg2[%c0, %c0_0] : memref<8x32xf32, #tpu.memory_space<vmem>>, vector<8x32xf32>
    %1 = tpu.concatenate %0, %0 in 1 : vector<8x32xf32>, vector<8x32xf32> -> vector<8x64xf32>
    %c0_1 = arith.constant 0 : index
    %c0_2 = arith.constant 0 : index
    %2 = vector.load %arg1[%c0_1, %c0_2] : memref<8x64xf32, #tpu.memory_space<vmem>>, vector<8x64xf32>
    %3 = arith.addf %2, %1 : vector<8x64xf32>
    %c0_3 = arith.constant 0 : index
    %c0_4 = arith.constant 0 : index
    %4 = vector.load %arg3[%c0_3, %c0_4] : memref<8x64xf32, #tpu.memory_space<vmem>>, vector<8x64xf32>
    tpu.vector_store %arg3[%c0_3, %c0_4], %3 {strides = array<i32>} : memref<8x64xf32, #tpu.memory_space<vmem>>, vector<8x64xf32>,
    return
  }
  func.func @transform_0(%arg0: i32) -> (i32, i32) {
    %c0_i32 = arith.constant 0 : i32
    %c0_i32_0 = arith.constant 0 : i32
    return %arg0, %c0_i32 : i32, i32
  }
  func.func @transform_1(%arg0: i32) -> (i32, i32) {
    %c0_i32 = arith.constant 0 : i32
    %c0_i32_0 = arith.constant 0 : i32
    return %arg0, %c0_i32 : i32, i32
  }
  func.func @transform_2(%arg0: i32) -> (i32, i32) {
    %c0_i32 = arith.constant 0 : i32
    %c0_i32_0 = arith.constant 0 : i32
    return %arg0, %c0_i32 : i32, i32
  }
}

</mosaic_0001>

<llo_original>
// kernel: tpu_custom_call.1
$region0: #{tpu_custom_call.1}
  #allocation0 [shape = 'u32[]', space=smem, size = 0x4, offset = 0x4, fixed_abs, tag = 'smem constant byte address 0x4 - core index']
  #allocation1 [shape = 'u32[72,128]{1,0:T(1,128)}', space=vmem, size = 0x9000, scoped, tag = 'internal scratch']
  %s0 = inlined_call_operand.vmem [shape: f32[8,64], index: 0, kind: input, shape index: {}]
  %s1 = inlined_call_operand.vmem [shape: f32[64,32], index: 1, kind: input, shape index: {}]
  %s2 = inlined_call_operand.hbm [shape: f32[8,64], index: 2, kind: output, shape index: {}]
  %s3 = sld [smem:[#allocation0]]
  $region18: #{tpu_custom_call.1} parent=0
    _
  %s5 = ssub.s32 1, %s3
  %s6 = scalar_select 0, %s5, %s3
  $region1: #{tpu_custom_call.1} parent=0
    #allocation2 [shape = 'u8[4096]{0}', space=vmem, size = 0x1000, scoped, tag = 'output window, operand 0, single buffered']
    #allocation3 [shape = 's32[1]{0}', space=sflag, size = 0x4, scoped, tag = 'scoped memory for tpu_custom_call.1']
    %7 = vsyncpa [#allocation3], 0
    // Predicated region
    $region2: #{tpu_custom_call.1} parent=1 // pred_check
      _
    $region3: #{tpu_custom_call.1} parent=1 // pred_check_branch
      %9 = sbr.rel (0) target = $region5
    $region4: #{tpu_custom_call.1} parent=1 // pred_region
      _
    $region5: #{tpu_custom_call.1} parent=1 // pred_fallthru
      _
    // Predicated region
    $region6: #{tpu_custom_call.1} parent=1 // pred_check
      _
    $region7: #{tpu_custom_call.1} parent=1 // pred_check_branch
      %11 = sbr.rel (0) target = $region9
    $region8: #{tpu_custom_call.1} parent=1 // pred_region
      _
    $region9: #{tpu_custom_call.1} parent=1 // pred_fallthru
      _
    %v12 = vld [vmem:[%s1] sm:$0xff]
    %14 = vrot.lane.b32.xlu0 %v12, 32
    %v15 = vpop.permute.xlu0 %14
    %vm17 = vcmask 261120
    %v18 = vsel %vm17, %v12, %v15
    %v19 = vld [vmem:[%s0] sm:$0xff]
    %v20 = vadd.f32 %v19, %v18
    %vm21 = vcmask 523264
    %22 = vst.msk [vmem:[#allocation2] sm:$0xff] %vm21, %v20
    // Predicated region
    $region10: #{tpu_custom_call.1} parent=1 // pred_check
      _
    $region11: #{tpu_custom_call.1} parent=1 // pred_check_branch
      %24 = sbr.rel (0) target = $region13
    $region12: #{tpu_custom_call.1} parent=1 // pred_region
      %26 = vsyncadd [#allocation3], 0
      %s28 = sshll.u32 [#allocation2], 4
      %s29 = int_to_ptr.vmem [resolvable:$true] %s28
      %s30 = sshll.u32 %s2, 4
      %s31 = int_to_ptr.hbm [resolvable:$true] %s30
      %33 = dma.vmem_to_hbm [thread:$0]  %s29, 128, %s31, [#allocation3]
    $region13: #{tpu_custom_call.1} parent=1 // pred_fallthru
      _
    // Predicated region
    $region14: #{tpu_custom_call.1} parent=1 // pred_check
      _
    $region15: #{tpu_custom_call.1} parent=1 // pred_check_branch
      %35 = sbr.rel (0) target = $region17
    $region16: #{tpu_custom_call.1} parent=1 // pred_region
      %37 = dma.done [#allocation3], 128
    $region17: #{tpu_custom_call.1} parent=1 // pred_fallthru
      _
    %38 = vsyncpa [#allocation3], 1

</llo_original>
